<compile_context>
chip_gen: v7x
topology: tpu7x:2x2x1
jax: 0.10.0
libtpu: 0.0.40
codegen_flags: <defaults>
</compile_context>

<pallas_src>
import jax
import jax.numpy as jnp
from jax.experimental import pallas as pl
from jax.experimental.pallas import tpu as pltpu


def _round_up(x, m):
    return ((x + m - 1) // m) * m


def _ffn_kernel(x_ref, w13_ref, w2_ref, o_ref, acc_ref):
    # x_ref:   (tm, D)      input row tile (same tile across the h axis)
    # w13_ref: (D, 2*th)    fused [gate | up] projection H-tile
    # w2_ref:  (th, D)      down-projection H-tile
    # o_ref:   (tm, D)      output tile (written on the last h step)
    # acc_ref: (tm, D) f32  accumulator scratch, persists across h steps
    h = pl.program_id(1)

    @pl.when(h == 0)
    def _():
        acc_ref[...] = jnp.zeros_like(acc_ref)

    x = x_ref[...]
    # Single fused matmul for gate+up projections (halves x reloads into MXU).
    gu = jnp.dot(x, w13_ref[...], preferred_element_type=jnp.float32)
    half = gu.shape[-1] // 2
    g = gu[:, :half]
    u = gu[:, half:]
    g = g * jax.nn.sigmoid(g)                 # SiLU in f32
    hidden = (g * u).astype(w2_ref.dtype)
    # Partial down-projection for this H-tile, accumulated in f32.
    acc_ref[...] += jnp.dot(hidden, w2_ref[...], preferred_element_type=jnp.float32)

    @pl.when(h == pl.num_programs(1) - 1)
    def _():
        o_ref[...] = acc_ref[...].astype(o_ref.dtype)


def _vmem_capacity():
    # Real per-TensorCore VMEM (64 MiB v7x, 128 MiB v5e/v6e), not the scoped
    # default.  Conservative fallback if the query is unavailable.
    try:
        info = pltpu.get_tpu_info()
        cap = getattr(info, "vmem_capacity_bytes", None)
        if cap:
            return int(cap)
    except Exception:
        pass
    return 64 * 1024 * 1024


def _vmem_bytes(tm, th, D, xb, wb, ob):
    """Estimated VMEM footprint for one grid step (double-buffered tiles +
    persistent accumulator + in-kernel temporaries gu / g*u / hidden)."""
    x_buf = 2 * tm * D * xb
    w13_buf = 2 * D * (2 * th) * wb
    w2_buf = 2 * th * D * wb
    o_buf = 2 * tm * D * ob
    acc = tm * D * 4
    temps = tm * (2 * th) * 4 + tm * th * 4 + tm * th * wb
    return x_buf + w13_buf + w2_buf + o_buf + acc + temps


def _choose_tiles(M, D, H, x_dtype, w_dtype, out_dtype, tm=None, th=None):
    xb = jnp.dtype(x_dtype).itemsize
    wb = jnp.dtype(w_dtype).itemsize
    ob = jnp.dtype(out_dtype).itemsize
    row_mult = 16 if xb < 4 else 8            # sublane multiple per dtype
    budget = int(_vmem_capacity() * 0.80)      # headroom for compiler scratch

    if tm is None:
        # Large row tiles amortize weight re-streaming (compute-bound needs
        # tm >= ~512 on v6e/v7x at bf16).
        tm = 512 if M >= 512 else _round_up(M, row_mult)
        # Keep >= 2 row tiles so the "parallel" axis feeds both v7x cores.
        if M >= 512 and pl.cdiv(M, tm) < 2:
            tm = _round_up(pl.cdiv(M, 2), row_mult)
    tm = _round_up(min(tm, _round_up(M, row_mult)), row_mult)
    tm = max(tm, row_mult)

    if th is None:
        th_cap = min(2048, _round_up(H, 128))
        th = 128
        t = th_cap
        while t >= 128:
            if _vmem_bytes(tm, t, D, xb, wb, ob) <= budget:
                th = t
                break
            t -= 128
    th = max(128, _round_up(min(th, _round_up(H, 128)), 128))

    # Last resort: if even th=128 overshoots the budget, shrink the row tile.
    while tm > row_mult and _vmem_bytes(tm, th, D, xb, wb, ob) > budget:
        tm = max(row_mult, _round_up(tm // 2, row_mult))
    return tm, th


def feed_forward(x, w1, w3, w2, *, tm=None, th=None):
    """x: [B, S, D]; w1, w3: [D, H]; w2: [H, D]  ->  [B, S, D]."""
    B, S, D = x.shape
    H = w1.shape[1]
    M = B * S

    tm, th = _choose_tiles(M, D, H, x.dtype, w1.dtype, x.dtype, tm=tm, th=th)

    # Zero-pad non-divisible shapes: padded hidden columns are exactly zero
    # (SiLU(0)*0 @ 0-rows), so they contribute nothing to the accumulator;
    # padded rows are sliced off the output.
    M_pad = _round_up(M, tm)
    H_pad = _round_up(H, th)
    n_m = M_pad // tm
    n_h = H_pad // th

    x2 = x.reshape(M, D)
    if M_pad != M:
        x2 = jnp.pad(x2, ((0, M_pad - M), (0, 0)))
    if H_pad != H:
        w1 = jnp.pad(w1, ((0, 0), (0, H_pad - H)))
        w3 = jnp.pad(w3, ((0, 0), (0, H_pad - H)))
        w2 = jnp.pad(w2, ((0, H_pad - H), (0, 0)))

    # Fuse gate/up weights per H-tile: fused tile h = [w1_tile_h | w3_tile_h],
    # so one (D, 2*th) BlockSpec feeds a single matmul per grid step.
    w13 = jnp.concatenate(
        [w1.reshape(D, n_h, th), w3.reshape(D, n_h, th)], axis=2
    ).reshape(D, 2 * H_pad)

    xb = jnp.dtype(x.dtype).itemsize
    wb = jnp.dtype(w1.dtype).itemsize
    cost = pl.CostEstimate(
        flops=6 * M * D * H,                          # three M*D*H matmuls
        transcendentals=M * H,                        # sigmoid in SiLU
        bytes_accessed=(x2.size * xb
                        + n_m * (w13.size + w2.size) * wb   # weights re-streamed per row tile
                        + M_pad * D * xb),
    )

    out = pl.pallas_call(
        _ffn_kernel,
        out_shape=jax.ShapeDtypeStruct((M_pad, D), x.dtype),
        grid_spec=pltpu.PrefetchScalarGridSpec(
            num_scalar_prefetch=0,
            grid=(n_m, n_h),                                     # reduction axis last
            in_specs=[
                pl.BlockSpec((tm, D), lambda i, h: (i, 0)),      # x row tile
                pl.BlockSpec((D, 2 * th), lambda i, h: (0, h)),  # fused w1|w3 tile
                pl.BlockSpec((th, D), lambda i, h: (h, 0)),      # w2 H-tile
            ],
            out_specs=pl.BlockSpec((tm, D), lambda i, h: (i, 0)),
            scratch_shapes=[pltpu.VMEM((tm, D), jnp.float32)],
        ),
        compiler_params=pltpu.CompilerParams(
            dimension_semantics=("parallel", "arbitrary"),
            vmem_limit_bytes=int(_vmem_capacity() * 0.85),
        ),
        cost_estimate=cost,
    )(x2, w13, w2)

    if M_pad != M:
        out = out[:M]
    return out.reshape(B, S, D)


def _reference(x, w1, w3, w2):
    g = x @ w1
    g = g * jax.nn.sigmoid(g)
    return (g * (x @ w3)) @ w2


if __name__ == "__main__":
    # Small-but-lane-dense test shapes; th=128 forces 2 hidden-tile steps so
    # the accumulator/reduction path is exercised even at toy size.
    B, S, D, H = 2, 8, 128, 256
    key = jax.random.PRNGKey(0)
    kx, k1, k3, k2 = jax.random.split(key, 4)

    x = jax.random.normal(kx, (B, S, D), dtype=jnp.float32)
    w1 = jax.random.normal(k1, (D, H), dtype=jnp.float32) * 0.05
    w3 = jax.random.normal(k3, (D, H), dtype=jnp.float32) * 0.05
    w2 = jax.random.normal(k2, (H, D), dtype=jnp.float32) * 0.05

    y = feed_forward(x, w1, w3, w2, th=128)
    y = jax.block_until_ready(y)

    y_ref = _reference(x, w1, w3, w2)
    assert y.shape == (B, S, D)
    err = float(jnp.max(jnp.abs(y - y_ref)))
    assert jnp.allclose(y, y_ref, atol=1e-4, rtol=1e-4), err

    print("KERNEL_OK")
</pallas_src>

<mosaic_0001>
module attributes {stable_mosaic.version = 11 : i64} {
  func.func @_ffn_kernel(%arg0: i32, %arg1: i32, %arg2: memref<16x128xf32, #tpu.memory_space<vmem>>, %arg3: memref<128x256xf32, #tpu.memory_space<vmem>>, %arg4: memref<128x128xf32, #tpu.memory_space<vmem>>, %arg5: memref<16x128xf32, #tpu.memory_space<vmem>>, %arg6: memref<16x128xf32, #tpu.memory_space<vmem>>) attributes {dimension_semantics = [#tpu.dimension_semantics<parallel>, #tpu.dimension_semantics<arbitrary>], iteration_bounds = array<i64: 1, 2>, scalar_prefetch = 0 : i64, scratch_operands = 1 : i64, tpu.core_type = #tpu.core_type<tc>, window_params = [{transform_indices = @transform_0, window_bounds = array<i64: 16, 128>}, {transform_indices = @transform_1, window_bounds = array<i64: 128, 256>}, {transform_indices = @transform_2, window_bounds = array<i64: 128, 128>}, {transform_indices = @transform_3, window_bounds = array<i64: 16, 128>}]} {
    %c0_i32 = arith.constant 0 : i32
    %0 = arith.cmpi eq, %arg1, %c0_i32 : i32
    %1 = arith.extui %0 : i1 to i32
    %c0_i32_0 = arith.constant 0 : i32
    %2 = arith.cmpi ne, %1, %c0_i32_0 : i32
    scf.if %2 {
      %cst_13 = arith.constant 0.000000e+00 : f32
      %23 = vector.broadcast %cst_13 : f32 to vector<16x128xf32>
      %c0_14 = arith.constant 0 : index
      %c0_15 = arith.constant 0 : index
      %24 = vector.load %arg6[%c0_14, %c0_15] : memref<16x128xf32, #tpu.memory_space<vmem>>, vector<16x128xf32>
      tpu.vector_store %arg6[%c0_14, %c0_15], %23 {strides = array<i32>} : memref<16x128xf32, #tpu.memory_space<vmem>>, vector<16x128xf32>,
    } else {
    }
    %c0 = arith.constant 0 : index
    %c0_1 = arith.constant 0 : index
    %3 = vector.load %arg2[%c0, %c0_1] : memref<16x128xf32, #tpu.memory_space<vmem>>, vector<16x128xf32>
    %c0_2 = arith.constant 0 : index
    %c0_3 = arith.constant 0 : index
    %4 = vector.load %arg3[%c0_2, %c0_3] : memref<128x256xf32, #tpu.memory_space<vmem>>, vector<128x256xf32>
    %cst = arith.constant dense<0.000000e+00> : vector<16x256xf32>
    %5 = tpu.matmul %3, %4, %cst {dimension_numbers = #tpu.dot_dimension_numbers<[1], [0], [0], [1], [0, 0, 1, 1], [], []>} : vector<16x128xf32>, vector<128x256xf32>, vector<16x256xf32> -> vector<16x256xf32>
    %6 = vector.extract_strided_slice %5 {offsets = [0, 0], sizes = [16, 128], strides = [1, 1]} : vector<16x256xf32> to vector<16x128xf32>
    %7 = vector.extract_strided_slice %5 {offsets = [0, 128], sizes = [16, 128], strides = [1, 1]} : vector<16x256xf32> to vector<16x128xf32>
    %8 = arith.negf %6 : vector<16x128xf32>
    %9 = math.exp %8 : vector<16x128xf32>
    %cst_4 = arith.constant 1.000000e+00 : f32
    %10 = vector.broadcast %cst_4 : f32 to vector<16x128xf32>
    %11 = arith.addf %10, %9 : vector<16x128xf32>
    %12 = arith.divf %10, %11 : vector<16x128xf32>
    %13 = arith.mulf %6, %12 : vector<16x128xf32>
    %14 = arith.mulf %13, %7 : vector<16x128xf32>
    %c0_5 = arith.constant 0 : index
    %c0_6 = arith.constant 0 : index
    %15 = vector.load %arg6[%c0_5, %c0_6] : memref<16x128xf32, #tpu.memory_space<vmem>>, vector<16x128xf32>
    %c0_7 = arith.constant 0 : index
    %c0_8 = arith.constant 0 : index
    %16 = vector.load %arg4[%c0_7, %c0_8] : memref<128x128xf32, #tpu.memory_space<vmem>>, vector<128x128xf32>
    %cst_9 = arith.constant dense<0.000000e+00> : vector<16x128xf32>
    %17 = tpu.matmul %14, %16, %cst_9 {dimension_numbers = #tpu.dot_dimension_numbers<[1], [0], [0], [1], [0, 0, 1, 1], [], []>} : vector<16x128xf32>, vector<128x128xf32>, vector<16x128xf32> -> vector<16x128xf32>
    %18 = arith.addf %15, %17 : vector<16x128xf32>
    %c0_10 = arith.constant 0 : index
    %c0_11 = arith.constant 0 : index
    %19 = vector.load %arg6[%c0_10, %c0_11] : memref<16x128xf32, #tpu.memory_space<vmem>>, vector<16x128xf32>
    tpu.vector_store %arg6[%c0_10, %c0_11], %18 {strides = array<i32>} : memref<16x128xf32, #tpu.memory_space<vmem>>, vector<16x128xf32>,
    %c1_i32 = arith.constant 1 : i32
    %20 = arith.cmpi eq, %arg1, %c1_i32 : i32
    %21 = arith.extui %20 : i1 to i32
    %c0_i32_12 = arith.constant 0 : i32
    %22 = arith.cmpi ne, %21, %c0_i32_12 : i32
    scf.if %22 {
      %c0_13 = arith.constant 0 : index
      %c0_14 = arith.constant 0 : index
      %23 = vector.load %arg6[%c0_13, %c0_14] : memref<16x128xf32, #tpu.memory_space<vmem>>, vector<16x128xf32>
      %c0_15 = arith.constant 0 : index
      %c0_16 = arith.constant 0 : index
      %24 = vector.load %arg5[%c0_15, %c0_16] : memref<16x128xf32, #tpu.memory_space<vmem>>, vector<16x128xf32>
      tpu.vector_store %arg5[%c0_15, %c0_16], %23 {strides = array<i32>} : memref<16x128xf32, #tpu.memory_space<vmem>>, vector<16x128xf32>,
    } else {
    }
    return
  }
  func.func @transform_0(%arg0: i32, %arg1: i32) -> (i32, i32) {
    %c0_i32 = arith.constant 0 : i32
    %c0_i32_0 = arith.constant 0 : i32
    return %arg0, %c0_i32 : i32, i32
  }
  func.func @transform_1(%arg0: i32, %arg1: i32) -> (i32, i32) {
    %c0_i32 = arith.constant 0 : i32
    %c0_i32_0 = arith.constant 0 : i32
    return %c0_i32, %arg1 : i32, i32
  }
  func.func @transform_2(%arg0: i32, %arg1: i32) -> (i32, i32) {
    %c0_i32 = arith.constant 0 : i32
    %c0_i32_0 = arith.constant 0 : i32
    return %arg1, %c0_i32 : i32, i32
  }
  func.func @transform_3(%arg0: i32, %arg1: i32) -> (i32, i32) {
    %c0_i32 = arith.constant 0 : i32
    %c0_i32_0 = arith.constant 0 : i32
    return %arg0, %c0_i32 : i32, i32
  }
}

</mosaic_0001>

<llo_original>
// kernel: tpu_custom_call.1
$region0: #{tpu_custom_call.1}
  #allocation0 [shape = 'u32[]', space=smem, size = 0x4, offset = 0x4, fixed_abs, tag = 'smem constant byte address 0x4 - core index']
  #allocation1 [shape = 'u32[144,128]{1,0:T(1,128)}', space=vmem, size = 0x12000, scoped, tag = 'internal scratch']
  #allocation2 [shape = 'f32[16,128]{1,0:T(8,128)}', space=vmem, size = 0x2000, scoped, tag = 'scratch operand']
  %s0 = inlined_call_operand.hbm [shape: f32[16,128], index: 0, kind: input, shape index: {}]
  %s1 = inlined_call_operand.hbm [shape: f32[128,512], index: 1, kind: input, shape index: {}]
  %s2 = inlined_call_operand.hbm [shape: f32[256,128], index: 2, kind: input, shape index: {}]
  %s3 = inlined_call_operand.hbm [shape: f32[16,128], index: 3, kind: output, shape index: {}]
  %s4 = sld [smem:[#allocation0]]
  $region65: #{tpu_custom_call.1} parent=0
    _
  %s6 = ssub.s32 1, %s4
  %s7 = scalar_select 0, %s6, %s4
  $region1: #{tpu_custom_call.1} parent=0
    #allocation3 [shape = 'u8[8192]{0}', space=vmem, size = 0x2000, scoped, tag = 'input window, operand 0, single buffered']
    #allocation4 [shape = 's32[2]{0}', space=sflag, size = 0x8, scoped, tag = 'scoped memory for tpu_custom_call.1']
    #allocation5 [shape = 's32[2]{0}', space=sflag, size = 0x8, scoped, tag = 'scoped memory for tpu_custom_call.1']
    #allocation6 [shape = 'u8[262144]{0}', space=vmem, size = 0x40000, scoped, tag = 'input window, operand 1']
    #allocation7 [shape = 's32[2]{0}', space=sflag, size = 0x8, scoped, tag = 'scoped memory for tpu_custom_call.1']
    #allocation8 [shape = 'u8[131072]{0}', space=vmem, size = 0x20000, scoped, tag = 'input window, operand 2']
    #allocation9 [shape = 'u8[8192]{0}', space=vmem, size = 0x2000, scoped, tag = 'output window, operand 0, single buffered']
    %8 = vsyncpa [#allocation4], 0
    %9 = vsyncpa [#allocation7], 0
    %s10 = scalar_lea.sflag [#allocation7], 1
    %11 = vsyncpa %s10, 0
    %12 = vsyncpa [#allocation5], 0
    loop: start=0, step=1, limit=4
    $region2: #{tpu_custom_call.1} parent=1 // loop_pre_header
      _
    $region3: #{tpu_custom_call.1} parent=1 // loop_header
      %s14 = sphi 0, %s18
      %p15 = scmp.ge.s32.totalorder %s14, 4
      %s21 = sphi 0, %s33
      %s22 = sphi 0, %s29
      %s23 = sphi 0, %s21
      %s24 = sphi 0, %s22
      %s25 = sphi 0, %s23
      %s26 = sphi 0, %s24
      %s36 = sphi 0, %s38
      %s39 = sphi 0, %s36
      %s40 = sphi 0, %s39
      %s56 = sphi 0, %s40
      %s62 = sphi 0, %s64
      %s65 = sphi 0, %s62
      %s66 = sphi 0, %s65
      %s82 = sphi 0, %s66
      %s88 = sphi 0, %s90
      %s91 = sphi 0, %s88
      %s92 = sphi 0, %s91
      %s108 = sphi 0, %s92
      %s114 = sphi 0, %s116
      %s117 = sphi 0, %s114
      %s118 = sphi 0, %s117
      %s134 = sphi 0, %s118
    $region4: #{tpu_custom_call.1} parent=1 // loop_header_branch
      %17 = sbr.rel (%p15) target = $region8
    $region5: #{tpu_custom_call.1} parent=1 // loop_body
      %s19 = ssub.s32 %s14, 1
      %s20 = ssub.s32 %s14, 2
      %s27 = sadd.s32 1, %s22
      %p28 = scmp.ge.s32.totalorder %s27, 2
      %s29 = scalar_select %p28, 0, %s27
      %s30 = sadd.s32 1, %s21
      %s31 = scalar_select %p28, %s30, %s21
      %p32 = scmp.ge.s32.totalorder %s31, 1
      %s33 = scalar_select %p32, 0, %s31
      %s34 = ssub.s32 %s21, %s33
      %p35 = scmp.eq.s32.totalorder %s34, 0
      %s37 = sadd.s32 %s36, 1
      %s38 = scalar_select %p35, %s36, %s37
      %p41 = pneg %p35
      %p42 = scmp.eq.s32.totalorder %s14, 1
      %p43 = por %p41, %p42
      %p44 = scmp.ne.s32.totalorder %s36, %s39
      %p45 = scmp.eq.s32.totalorder %s14, 0
      %p46 = por %p44, %p45
      %p47 = scmp.ne.s32.totalorder %s36, %s39
      %p48 = scmp.eq.s32.totalorder %s19, 1
      %p49 = por %p47, %p48
      %p50 = scmp.ne.s32.totalorder %s39, %s40
      %p51 = scmp.eq.s32.totalorder %s19, 0
      %p52 = por %p50, %p51
      %p53 = scmp.ne.s32.totalorder %s39, %s40
      %p54 = scmp.eq.s32.totalorder %s20, 1
      %p55 = por %p53, %p54
      %p57 = scmp.ne.s32.totalorder %s40, %s56
      %p58 = scmp.eq.s32.totalorder %s20, 0
      %p59 = por %p57, %p58
      %s60 = ssub.s32 %s22, %s29
      %p61 = scmp.eq.s32.totalorder %s60, 0
      %s63 = sadd.s32 %s62, 1
      %s64 = scalar_select %p61, %s62, %s63
      %p67 = pneg %p61
      %p68 = scmp.eq.s32.totalorder %s14, 1
      %p69 = por %p67, %p68
      %p70 = scmp.ne.s32.totalorder %s62, %s65
      %p71 = scmp.eq.s32.totalorder %s14, 0
      %p72 = por %p70, %p71
      %p73 = scmp.ne.s32.totalorder %s62, %s65
      %p74 = scmp.eq.s32.totalorder %s19, 1
      %p75 = por %p73, %p74
      %p76 = scmp.ne.s32.totalorder %s65, %s66
      %p77 = scmp.eq.s32.totalorder %s19, 0
      %p78 = por %p76, %p77
      %p79 = scmp.ne.s32.totalorder %s65, %s66
      %p80 = scmp.eq.s32.totalorder %s20, 1
      %p81 = por %p79, %p80
      %p83 = scmp.ne.s32.totalorder %s66, %s82
      %p84 = scmp.eq.s32.totalorder %s20, 0
      %p85 = por %p83, %p84
      %s86 = ssub.s32 %s22, %s29
      %p87 = scmp.eq.s32.totalorder %s86, 0
      %s89 = sadd.s32 %s88, 1
      %s90 = scalar_select %p87, %s88, %s89
      %p93 = pneg %p87
      %p94 = scmp.eq.s32.totalorder %s14, 1
      %p95 = por %p93, %p94
      %p96 = scmp.ne.s32.totalorder %s88, %s91
      %p97 = scmp.eq.s32.totalorder %s14, 0
      %p98 = por %p96, %p97
      %p99 = scmp.ne.s32.totalorder %s88, %s91
      %p100 = scmp.eq.s32.totalorder %s19, 1
      %p101 = por %p99, %p100
      %p102 = scmp.ne.s32.totalorder %s91, %s92
      %p103 = scmp.eq.s32.totalorder %s19, 0
      %p104 = por %p102, %p103
      %p105 = scmp.ne.s32.totalorder %s91, %s92
      %p106 = scmp.eq.s32.totalorder %s20, 1
      %p107 = por %p105, %p106
      %p109 = scmp.ne.s32.totalorder %s92, %s108
      %p110 = scmp.eq.s32.totalorder %s20, 0
      %p111 = por %p109, %p110
      %s112 = ssub.s32 %s21, %s33
      %p113 = scmp.eq.s32.totalorder %s112, 0
      %s115 = sadd.s32 %s114, 1
      %s116 = scalar_select %p113, %s114, %s115
      %p119 = pneg %p113
      %p120 = scmp.eq.s32.totalorder %s14, 1
      %p121 = por %p119, %p120
      %p122 = scmp.ne.s32.totalorder %s114, %s117
      %p123 = scmp.eq.s32.totalorder %s14, 0
      %p124 = por %p122, %p123
      %p125 = scmp.ne.s32.totalorder %s114, %s117
      %p126 = scmp.eq.s32.totalorder %s19, 1
      %p127 = por %p125, %p126
      %p128 = scmp.ne.s32.totalorder %s117, %s118
      %p129 = scmp.eq.s32.totalorder %s19, 0
      %p130 = por %p128, %p129
      %p131 = scmp.ne.s32.totalorder %s117, %s118
      %p132 = scmp.eq.s32.totalorder %s20, 1
      %p133 = por %p131, %p132
      %p135 = scmp.ne.s32.totalorder %s118, %s134
      %p136 = scmp.eq.s32.totalorder %s20, 0
      %p137 = por %p135, %p136
      %p138 = scmp.le.s32.totalorder 1, %s14
      %p139 = scmp.lt.s32.totalorder %s14, 3
      %p140 = pnand %p138, %p139
      %p141 = pneg %p140
      // Predicated region
      $region9: #{tpu_custom_call.1} parent=5 // pred_check
        _
      $region10: #{tpu_custom_call.1} parent=5 // pred_check_branch
        %143 = sbr.rel (%p140) target = $region12
      $region11: #{tpu_custom_call.1} parent=5 // pred_region
        %s144 = ssub.s32 %s14, 1
        // Predicated region
        $region13: #{tpu_custom_call.1} parent=11 // pred_check
          %p145 = pneg %p52
        $region14: #{tpu_custom_call.1} parent=11 // pred_check_branch
          %147 = sbr.rel (%p145) target = $region16
        $region15: #{tpu_custom_call.1} parent=11 // pred_region
          %s148 = smul.u32 2, %s23
          %s150 = ssub.s32 256, 256
          %151 = vsyncadd [#allocation4], %s150
          %s152 = smul.addr %s148, 128
          %s153 = scalar_lea.hbm %s0, %s152
          %s154 = sshll.u32 [#allocation3], 4
          %s155 = int_to_ptr.vmem [resolvable:$true] %s154
          %160 = dma.hbm_to_vmem [thread:$0]  %s153, 256, %s155, [#allocation4], 128, 128, 8
        $region16: #{tpu_custom_call.1} parent=11 // pred_fallthru
          _
      $region12: #{tpu_custom_call.1} parent=5 // pred_fallthru
        _
      %p161 = scmp.lt.s32.totalorder %s14, 2
      // Predicated region
      $region17: #{tpu_custom_call.1} parent=5 // pred_check
        %p162 = pneg %p161
      $region18: #{tpu_custom_call.1} parent=5 // pred_check_branch
        %164 = sbr.rel (%p162) target = $region20
      $region19: #{tpu_custom_call.1} parent=5 // pred_region
        // Predicated region
        $region21: #{tpu_custom_call.1} parent=19 // pred_check
          %p165 = pneg %p72
        $region22: #{tpu_custom_call.1} parent=19 // pred_check_branch
          %167 = sbr.rel (%p165) target = $region24
        $region23: #{tpu_custom_call.1} parent=19 // pred_region
          %s168 = sand.u32 %s14, 1
          %s169 = scalar_lea.sflag [#allocation7], %s168
          %s170 = sand.u32 %s62, 1
          %s171 = smul.addr %s170, 256
          %s172 = scalar_lea.vmem [#allocation6], %s171
          %s173 = smul.u32 2, %s22
          %s175 = ssub.s32 4096, 4096
          %176 = vsyncadd %s169, %s175
          %s177 = smul.addr %s173, 128
          %s178 = scalar_lea.hbm %s1, %s177
          %s179 = sshll.u32 %s172, 4
          %s180 = int_to_ptr.vmem [resolvable:$true] %s179
          %185 = dma.hbm_to_vmem [thread:$0]  %s178, 4096, %s180, %s169, 512, 256, 16
        $region24: #{tpu_custom_call.1} parent=19 // pred_fallthru
          _
        // Predicated region
        $region25: #{tpu_custom_call.1} parent=19 // pred_check
          %p186 = pneg %p98
        $region26: #{tpu_custom_call.1} parent=19 // pred_check_branch
          %188 = sbr.rel (%p186) target = $region28
        $region27: #{tpu_custom_call.1} parent=19 // pred_region
          %s189 = sand.u32 %s14, 1
          %s190 = scalar_lea.sflag [#allocation7], %s189
          %s191 = sand.u32 %s88, 1
          %s192 = smul.addr %s191, 128
          %s193 = scalar_lea.vmem [#allocation8], %s192
          %s194 = smul.u32 16, %s22
          %s196 = ssub.s32 2048, 2048
          %197 = vsyncadd %s190, %s196
          %s198 = smul.addr %s194, 128
          %s199 = scalar_lea.hbm %s2, %s198
          %s200 = sshll.u32 %s193, 4
          %s201 = int_to_ptr.vmem [resolvable:$true] %s200
          %206 = dma.hbm_to_vmem [thread:$0]  %s199, 2048, %s201, %s190, 128, 128, 8
        $region28: #{tpu_custom_call.1} parent=19 // pred_fallthru
          _
      $region20: #{tpu_custom_call.1} parent=5 // pred_fallthru
        _
      %p207 = scmp.le.s32.totalorder 1, %s14
      %p208 = scmp.lt.s32.totalorder %s14, 3
      %p209 = pnand %p207, %p208
      %p210 = pneg %p209
      // Predicated region
      $region29: #{tpu_custom_call.1} parent=5 // pred_check
        _
      $region30: #{tpu_custom_call.1} parent=5 // pred_check_branch
        %212 = sbr.rel (%p209) target = $region32
      $region31: #{tpu_custom_call.1} parent=5 // pred_region
        %s213 = ssub.s32 %s14, 1
        // Predicated region
        $region33: #{tpu_custom_call.1} parent=31 // pred_check
          %p214 = pneg %p52
        $region34: #{tpu_custom_call.1} parent=31 // pred_check_branch
          %216 = sbr.rel (%p214) target = $region36
        $region35: #{tpu_custom_call.1} parent=31 // pred_region
          %217 = dma.done [#allocation4], 256
        $region36: #{tpu_custom_call.1} parent=31 // pred_fallthru
          _
        %s218 = sand.u32 %s19, 1
        %s219 = scalar_lea.sflag [#allocation7], %s218
        %s220 = sand.u32 %s65, 1
        %s221 = smul.addr %s220, 256
        %s222 = scalar_lea.vmem [#allocation6], %s221
        // Predicated region
        $region37: #{tpu_custom_call.1} parent=31 // pred_check
          %p223 = pneg %p78
        $region38: #{tpu_custom_call.1} parent=31 // pred_check_branch
          %225 = sbr.rel (%p223) target = $region40
        $region39: #{tpu_custom_call.1} parent=31 // pred_region
          %226 = dma.done %s219, 4096
        $region40: #{tpu_custom_call.1} parent=31 // pred_fallthru
          _
        %s227 = sand.u32 %s19, 1
        %s228 = scalar_lea.sflag [#allocation7], %s227
        %s229 = sand.u32 %s91, 1
        %s230 = smul.addr %s229, 128
        %s231 = scalar_lea.vmem [#allocation8], %s230
        // Predicated region
        $region41: #{tpu_custom_call.1} parent=31 // pred_check
          %p232 = pneg %p104
        $region42: #{tpu_custom_call.1} parent=31 // pred_check_branch
          %234 = sbr.rel (%p232) target = $region44
        $region43: #{tpu_custom_call.1} parent=31 // pred_region
          %235 = dma.done %s228, 2048
        $region44: #{tpu_custom_call.1} parent=31 // pred_fallthru
          _
        %p236 = pneg %p52
        %p237 = pneg %p49
        %s238 = sand.u32 %s19, 1
        %s239 = scalar_lea.sflag [#allocation7], %s238
        %s240 = sand.u32 %s65, 1
        %s241 = smul.addr %s240, 256
        %s242 = scalar_lea.vmem [#allocation6], %s241
        %p243 = pneg %p78
        %p244 = pneg %p75
        %s245 = sand.u32 %s19, 1
        %s246 = scalar_lea.sflag [#allocation7], %s245
        %s247 = sand.u32 %s91, 1
        %s248 = smul.addr %s247, 128
        %s249 = scalar_lea.vmem [#allocation8], %s248
        %p250 = pneg %p104
        %p251 = pneg %p101
        %p252 = pneg %p130
        %p253 = pneg %p127
        %s254 = smul.u32 2, %s23
        %s255 = smul.u32 2, %s24
        %s256 = smul.u32 16, %s24
        %s257 = smul.u32 2, %s23
        %p258 = scmp.eq.s32.totalorder %s24, 0
        // Predicated region
        $region45: #{tpu_custom_call.1} parent=31 // pred_check
          %p259 = pneg %p258
        $region46: #{tpu_custom_call.1} parent=31 // pred_check_branch
          %261 = sbr.rel (%p259) target = $region48
        $region47: #{tpu_custom_call.1} parent=31 // pred_region
          %262 = vst [vmem:[#allocation2] sm:$0xff] 0.0
          %263 = vst [vmem:[#allocation2 + $0x8] sm:$0xff] 0.0
        $region48: #{tpu_custom_call.1} parent=31 // pred_fallthru
          _
        %v264 = vld [vmem:[#allocation3] sm:$0xff]
        %v265 = vld [vmem:[#allocation3 + $0x8] sm:$0xff]
        %v266 = vld [vmem:[%s222] sm:$0xff]
        %v267 = vld [vmem:[%s222 + $0x8] sm:$0xff]
        %v268 = vld [vmem:[%s222 + $0x10] sm:$0xff]
        %v269 = vld [vmem:[%s222 + $0x18] sm:$0xff]
        %v270 = vld [vmem:[%s222 + $0x20] sm:$0xff]
        %v271 = vld [vmem:[%s222 + $0x28] sm:$0xff]
        %v272 = vld [vmem:[%s222 + $0x30] sm:$0xff]
        %v273 = vld [vmem:[%s222 + $0x38] sm:$0xff]
        %v274 = vld [vmem:[%s222 + $0x40] sm:$0xff]
        %v275 = vld [vmem:[%s222 + $0x48] sm:$0xff]
        %v276 = vld [vmem:[%s222 + $0x50] sm:$0xff]
        %v277 = vld [vmem:[%s222 + $0x58] sm:$0xff]
        %v278 = vld [vmem:[%s222 + $0x60] sm:$0xff]
        %v279 = vld [vmem:[%s222 + $0x68] sm:$0xff]
        %v280 = vld [vmem:[%s222 + $0x70] sm:$0xff]
        %v281 = vld [vmem:[%s222 + $0x78] sm:$0xff]
        %v282 = vld [vmem:[%s222 + $0x80] sm:$0xff]
        %v283 = vld [vmem:[%s222 + $0x88] sm:$0xff]
        %v284 = vld [vmem:[%s222 + $0x90] sm:$0xff]
        %v285 = vld [vmem:[%s222 + $0x98] sm:$0xff]
        %v286 = vld [vmem:[%s222 + $0xa0] sm:$0xff]
        %v287 = vld [vmem:[%s222 + $0xa8] sm:$0xff]
        %v288 = vld [vmem:[%s222 + $0xb0] sm:$0xff]
        %v289 = vld [vmem:[%s222 + $0xb8] sm:$0xff]
        %v290 = vld [vmem:[%s222 + $0xc0] sm:$0xff]
        %v291 = vld [vmem:[%s222 + $0xc8] sm:$0xff]
        %v292 = vld [vmem:[%s222 + $0xd0] sm:$0xff]
        %v293 = vld [vmem:[%s222 + $0xd8] sm:$0xff]
        %v294 = vld [vmem:[%s222 + $0xe0] sm:$0xff]
        %v295 = vld [vmem:[%s222 + $0xe8] sm:$0xff]
        %v296 = vld [vmem:[%s222 + $0xf0] sm:$0xff]
        %v297 = vld [vmem:[%s222 + $0xf8] sm:$0xff]
        %298 = vmatprep.subr.mxu0 %v267
        %299 = vmatpush1.msra.mxu0 %v266
        %300 = vmatprep.subr.mxu0 %v269
        %301 = vmatpush1.msra.mxu0 %v268
        %302 = vmatprep.subr.mxu0 %v271
        %303 = vmatpush1.msra.mxu0 %v270
        %304 = vmatprep.subr.mxu0 %v273
        %305 = vmatpush1.msra.mxu0 %v272
        %306 = vmatprep.subr.mxu0 %v275
        %307 = vmatpush1.msra.mxu0 %v274
        %308 = vmatprep.subr.mxu0 %v277
        %309 = vmatpush1.msra.mxu0 %v276
        %310 = vmatprep.subr.mxu0 %v279
        %311 = vmatpush1.msra.mxu0 %v278
        %312 = vmatprep.subr.mxu0 %v281
        %313 = vmatpush1.msra.mxu0 %v280
        %314 = vmatprep.subr.mxu0 %v283
        %315 = vmatpush1.msra.mxu0 %v282
        %316 = vmatprep.subr.mxu0 %v285
        %317 = vmatpush1.msra.mxu0 %v284
        %318 = vmatprep.subr.mxu0 %v287
        %319 = vmatpush1.msra.mxu0 %v286
        %320 = vmatprep.subr.mxu0 %v289
        %321 = vmatpush1.msra.mxu0 %v288
        %322 = vmatprep.subr.mxu0 %v291
        %323 = vmatpush1.msra.mxu0 %v290
        %324 = vmatprep.subr.mxu0 %v293
        %325 = vmatpush1.msra.mxu0 %v292
        %326 = vmatprep.subr.mxu0 %v295
        %327 = vmatpush1.msra.mxu0 %v294
        %328 = vmatprep.subr.mxu0 %v297
        %329 = vmatpush1.msra.mxu0 %v296
        %330 = vmatprep.subr.mxu0 0.0
        %331 = vmatpush1.msra.mxu0 0.0
        %332 = vmatprep.subr.mxu0 0.0
        %333 = vmatpush1.msra.mxu0 0.0
        %334 = vmatprep.subr.mxu0 0.0
        %335 = vmatpush1.msra.mxu0 0.0
        %336 = vmatprep.subr.mxu0 0.0
        %337 = vmatpush1.msra.mxu0 0.0
        %338 = vmatprep.subr.mxu0 0.0
        %339 = vmatpush1.msra.mxu0 0.0
        %340 = vmatprep.subr.mxu0 0.0
        %341 = vmatpush1.msra.mxu0 0.0
        %342 = vmatprep.subr.mxu0 0.0
        %343 = vmatpush1.msra.mxu0 0.0
        %344 = vmatprep.subr.mxu0 0.0
        %345 = vmatpush1.msra.mxu0 0.0
        %346 = vmatprep.subr.mxu0 0.0
        %347 = vmatpush1.msra.mxu0 0.0
        %348 = vmatprep.subr.mxu0 0.0
        %349 = vmatpush1.msra.mxu0 0.0
        %350 = vmatprep.subr.mxu0 0.0
        %351 = vmatpush1.msra.mxu0 0.0
        %352 = vmatprep.subr.mxu0 0.0
        %353 = vmatpush1.msra.mxu0 0.0
        %354 = vmatprep.subr.mxu0 0.0
        %355 = vmatpush1.msra.mxu0 0.0
        %356 = vmatprep.subr.mxu0 0.0
        %357 = vmatpush1.msra.mxu0 0.0
        %358 = vmatprep.subr.mxu0 0.0
        %359 = vmatpush1.msra.mxu0 0.0
        %360 = vmatprep.subr.mxu0 0.0
        %361 = vmatpush1.msra.mxu0 0.0
        %362 = vmatprep.mubr.f32.mxu0 0.0
        %363 = vmatmul.mubr.f32.gmra.mrb[0].mxu0 %v264
        %v364 = vpop.f32.mrb[0].mxu0
        %v365 = vadd.f32 0.0, %v364
        %v366 = vpop.f32.mrb[0].mxu0
        %v367 = vadd.f32 0.0, %v366
        %368 = vmatprep.mubr.f32.mxu0 0.0
        %369 = vmatmul.mubr.f32.gmra.mrb[0].mxu0 %v265
        %v370 = vpop.f32.mrb[0].mxu0
        %v371 = vadd.f32 0.0, %v370
        %v372 = vpop.f32.mrb[0].mxu0
        %v373 = vadd.f32 0.0, %v372
        %374 = vdwg.mxu0
        %v375 = vxor.u32 %v365, 2147483648
        %v376 = vxor.u32 %v371, 2147483648
        %v377 = vmul.f32 %v375, 1.442695
        %v378 = vpow.pop %v377
        %v379 = vmul.f32 %v376, 1.442695
        %v380 = vpow.pop %v379
        %v381 = vadd.f32 %v378, 1.0
        %v382 = vadd.f32 %v380, 1.0
        %v383 = vrcp.pop %v381
        %v384 = vmul.f32 1.0, %v383
        %v385 = vrcp.pop %v382
        %v386 = vmul.f32 1.0, %v385
        %v387 = vmul.f32 %v365, %v384
        %v388 = vmul.f32 %v371, %v386
        %v389 = vmul.f32 %v387, %v367
        %v390 = vmul.f32 %v388, %v373
        %v391 = vld [vmem:[#allocation2] sm:$0xff]
        %v392 = vld [vmem:[#allocation2 + $0x8] sm:$0xff]
        %v393 = vld [vmem:[%s231] sm:$0xff]
        %v394 = vld [vmem:[%s231 + $0x8] sm:$0xff]
        %v395 = vld [vmem:[%s231 + $0x10] sm:$0xff]
        %v396 = vld [vmem:[%s231 + $0x18] sm:$0xff]
        %v397 = vld [vmem:[%s231 + $0x20] sm:$0xff]
        %v398 = vld [vmem:[%s231 + $0x28] sm:$0xff]
        %v399 = vld [vmem:[%s231 + $0x30] sm:$0xff]
        %v400 = vld [vmem:[%s231 + $0x38] sm:$0xff]
        %v401 = vld [vmem:[%s231 + $0x40] sm:$0xff]
        %v402 = vld [vmem:[%s231 + $0x48] sm:$0xff]
        %v403 = vld [vmem:[%s231 + $0x50] sm:$0xff]
        %v404 = vld [vmem:[%s231 + $0x58] sm:$0xff]
        %v405 = vld [vmem:[%s231 + $0x60] sm:$0xff]
        %v406 = vld [vmem:[%s231 + $0x68] sm:$0xff]
        %v407 = vld [vmem:[%s231 + $0x70] sm:$0xff]
        %v408 = vld [vmem:[%s231 + $0x78] sm:$0xff]
        %409 = vmatprep.subr.mxu0 0.0
        %410 = vmatpush1.msra.mxu0 %v393
        %411 = vmatprep.subr.mxu0 0.0
        %412 = vmatpush1.msra.mxu0 %v394
        %413 = vmatprep.subr.mxu0 0.0
        %414 = vmatpush1.msra.mxu0 %v395
        %415 = vmatprep.subr.mxu0 0.0
        %416 = vmatpush1.msra.mxu0 %v396
        %417 = vmatprep.subr.mxu0 0.0
        %418 = vmatpush1.msra.mxu0 %v397
        %419 = vmatprep.subr.mxu0 0.0
        %420 = vmatpush1.msra.mxu0 %v398
        %421 = vmatprep.subr.mxu0 0.0
        %422 = vmatpush1.msra.mxu0 %v399
        %423 = vmatprep.subr.mxu0 0.0
        %424 = vmatpush1.msra.mxu0 %v400
        %425 = vmatprep.subr.mxu0 0.0
        %426 = vmatpush1.msra.mxu0 %v401
        %427 = vmatprep.subr.mxu0 0.0
        %428 = vmatpush1.msra.mxu0 %v402
        %429 = vmatprep.subr.mxu0 0.0
        %430 = vmatpush1.msra.mxu0 %v403
        %431 = vmatprep.subr.mxu0 0.0
        %432 = vmatpush1.msra.mxu0 %v404
        %433 = vmatprep.subr.mxu0 0.0
        %434 = vmatpush1.msra.mxu0 %v405
        %435 = vmatprep.subr.mxu0 0.0
        %436 = vmatpush1.msra.mxu0 %v406
        %437 = vmatprep.subr.mxu0 0.0
        %438 = vmatpush1.msra.mxu0 %v407
        %439 = vmatprep.subr.mxu0 0.0
        %440 = vmatpush1.msra.mxu0 %v408
        %441 = vmatprep.subr.mxu0 0.0
        %442 = vmatpush1.msra.mxu0 0.0
        %443 = vmatprep.subr.mxu0 0.0
        %444 = vmatpush1.msra.mxu0 0.0
        %445 = vmatprep.subr.mxu0 0.0
        %446 = vmatpush1.msra.mxu0 0.0
        %447 = vmatprep.subr.mxu0 0.0
        %448 = vmatpush1.msra.mxu0 0.0
        %449 = vmatprep.subr.mxu0 0.0
        %450 = vmatpush1.msra.mxu0 0.0
        %451 = vmatprep.subr.mxu0 0.0
        %452 = vmatpush1.msra.mxu0 0.0
        %453 = vmatprep.subr.mxu0 0.0
        %454 = vmatpush1.msra.mxu0 0.0
        %455 = vmatprep.subr.mxu0 0.0
        %456 = vmatpush1.msra.mxu0 0.0
        %457 = vmatprep.subr.mxu0 0.0
        %458 = vmatpush1.msra.mxu0 0.0
        %459 = vmatprep.subr.mxu0 0.0
        %460 = vmatpush1.msra.mxu0 0.0
        %461 = vmatprep.subr.mxu0 0.0
        %462 = vmatpush1.msra.mxu0 0.0
        %463 = vmatprep.subr.mxu0 0.0
        %464 = vmatpush1.msra.mxu0 0.0
        %465 = vmatprep.subr.mxu0 0.0
        %466 = vmatpush1.msra.mxu0 0.0
        %467 = vmatprep.subr.mxu0 0.0
        %468 = vmatpush1.msra.mxu0 0.0
        %469 = vmatprep.subr.mxu0 0.0
        %470 = vmatpush1.msra.mxu0 0.0
        %471 = vmatprep.subr.mxu0 0.0
        %472 = vmatpush1.msra.mxu0 0.0
        %473 = vmatprep.mubr.f32.mxu0 0.0
        %474 = vmatmul.mubr.f32.gmra.mrb[0].mxu0 %v389
        %v475 = vpop.f32.mrb[0].mxu0
        %v476 = vadd.f32 0.0, %v475
        %v477 = vpop.f32.mrb[0].mxu0
        %478 = vmatprep.mubr.f32.mxu0 0.0
        %479 = vmatmul.mubr.f32.gmra.mrb[0].mxu0 %v390
        %v480 = vpop.f32.mrb[0].mxu0
        %v481 = vadd.f32 0.0, %v480
        %v482 = vpop.f32.mrb[0].mxu0
        %483 = vdwg.mxu0
        %v484 = vadd.f32 %v391, %v476
        %v485 = vadd.f32 %v392, %v481
        %486 = vst [vmem:[#allocation2] sm:$0xff] %v484
        %487 = vst [vmem:[#allocation2 + $0x8] sm:$0xff] %v485
        %p488 = scmp.eq.s32.totalorder %s24, 1
        // Predicated region
        $region49: #{tpu_custom_call.1} parent=31 // pred_check
          %p489 = pneg %p488
        $region50: #{tpu_custom_call.1} parent=31 // pred_check_branch
          %491 = sbr.rel (%p489) target = $region52
        $region51: #{tpu_custom_call.1} parent=31 // pred_region
          %v492 = vld [vmem:[#allocation2] sm:$0xff]
          %v493 = vld [vmem:[#allocation2 + $0x8] sm:$0xff]
          %494 = vst [vmem:[#allocation9] sm:$0xff] %v492
          %495 = vst [vmem:[#allocation9 + $0x8] sm:$0xff] %v493
        $region52: #{tpu_custom_call.1} parent=31 // pred_fallthru
          _
        // Predicated region
        $region53: #{tpu_custom_call.1} parent=31 // pred_check
          %p496 = pneg %p127
        $region54: #{tpu_custom_call.1} parent=31 // pred_check_branch
          %498 = sbr.rel (%p496) target = $region56
        $region55: #{tpu_custom_call.1} parent=31 // pred_region
          %s499 = smul.u32 2, %s23
          %s501 = ssub.s32 256, 256
          %502 = vsyncadd [#allocation5], %s501
          %s503 = smul.addr %s499, 128
          %s504 = scalar_lea.hbm %s3, %s503
          %s505 = sshll.u32 [#allocation9], 4
          %s506 = int_to_ptr.vmem [resolvable:$true] %s505
          %511 = dma.vmem_to_hbm [thread:$0]  %s506, 256, %s504, [#allocation5], 128, 128, 8
        $region56: #{tpu_custom_call.1} parent=31 // pred_fallthru
          _
        // Predicated region
        $region57: #{tpu_custom_call.1} parent=31 // pred_check
          %p512 = pneg %p127
        $region58: #{tpu_custom_call.1} parent=31 // pred_check_branch
          %514 = sbr.rel (%p512) target = $region60
        $region59: #{tpu_custom_call.1} parent=31 // pred_region
          %515 = dma.done [#allocation5], 256
        $region60: #{tpu_custom_call.1} parent=31 // pred_fallthru
          _
      $region32: #{tpu_custom_call.1} parent=5 // pred_fallthru
        _
      %p516 = scmp.le.s32.totalorder 2, %s14
      // Predicated region
      $region61: #{tpu_custom_call.1} parent=5 // pred_check
        %p517 = pneg %p516
      $region62: #{tpu_custom_call.1} parent=5 // pred_check_branch
        %519 = sbr.rel (%p517) target = $region64
      $region63: #{tpu_custom_call.1} parent=5 // pred_region
        %s520 = ssub.s32 %s14, 2
      $region64: #{tpu_custom_call.1} parent=5 // pred_fallthru
        _
    $region6: #{tpu_custom_call.1} parent=1 // loop_footer
      %s18 = sadd.s32 1, %s14
    $region7: #{tpu_custom_call.1} parent=1 // loop_footer_branch
      %13 = sbr.rel target = $region3
    $region8: #{tpu_custom_call.1} parent=1 // loop_exit
      _
    %521 = vsyncpa [#allocation4], 1
    %s522 = scalar_lea.sflag [#allocation4], 1
    %523 = vsyncpa %s522, 1
    %524 = vsyncpa [#allocation7], 1
    %s525 = scalar_lea.sflag [#allocation7], 1
    %526 = vsyncpa %s525, 1
    %527 = vsyncpa [#allocation5], 1
    %s528 = scalar_lea.sflag [#allocation5], 1
    %529 = vsyncpa %s528, 1

</llo_original>
